<compile_context>
chip_gen: v5e
topology: v5e:2x2
jax: 0.10.0
libtpu: 0.0.40
codegen_flags: <defaults>
</compile_context>

<pallas_src>
import functools
import math

import jax
import jax.numpy as jnp
from jax import lax
from jax.experimental import pallas as pl
from jax.experimental.pallas import tpu as pltpu

_RMS_EPS = 1e-6


def _rmsnorm(v, w):
    ms = jnp.mean(v * v, axis=-1, keepdims=True)
    return v * lax.rsqrt(ms + _RMS_EPS) * w


# --------------------------------------------------------------------------- #
# Pass 1: K/V precompute (RMSNorm + Wk/Wv projection, head-grouped, bf16)
# --------------------------------------------------------------------------- #
def _kv_proj_kernel(x_ref, n1_ref, wk_ref, wv_ref, k_ref, v_ref,
                    *, n_kv_heads, head_dim):
    KV, hd = n_kv_heads, head_dim
    h = _rmsnorm(x_ref[0], n1_ref[0]).astype(jnp.bfloat16)               # (Tkv, D)
    k2 = jnp.dot(h, wk_ref[...], preferred_element_type=jnp.float32)     # (Tkv, KV*hd)
    v2 = jnp.dot(h, wv_ref[...], preferred_element_type=jnp.float32)
    # head split = static lane slices + major-axis stack (pure layout op)
    k_ref[0] = jnp.stack(
        [k2[:, g * hd:(g + 1) * hd] for g in range(KV)], axis=0).astype(jnp.bfloat16)
    v_ref[0] = jnp.stack(
        [v2[:, g * hd:(g + 1) * hd] for g in range(KV)], axis=0).astype(jnp.bfloat16)


# --------------------------------------------------------------------------- #
# Pass 2: flash attention (online softmax) + output projection + residual
# --------------------------------------------------------------------------- #
def _attn_kernel(x_ref, k_ref, v_ref, n1_ref, wq_ref, wo_ref, o_ref,
                 q_sc, m_sc, l_sc, acc_sc,
                 *, n_heads, n_kv_heads, head_dim, q_tile, kv_tile):
    H, KV, hd = n_heads, n_kv_heads, head_dim
    G = H // KV
    qi = pl.program_id(1)
    ki = pl.program_id(2)
    scale = 1.0 / math.sqrt(hd)

    # -- first kv step: project Q for this q tile, reset online-softmax state
    @pl.when(ki == 0)
    def _init():
        hq = _rmsnorm(x_ref[0], n1_ref[0]).astype(jnp.bfloat16)               # (Tq, D)
        q2 = jnp.dot(hq, wq_ref[...], preferred_element_type=jnp.float32)     # (Tq, H*hd)
        q2 = (q2 * scale).astype(jnp.bfloat16)
        # GQA-grouped, head-split Q in bf16: (KV, G*Tq, hd)
        q_sc[...] = jnp.stack(
            [jnp.concatenate(
                [q2[:, (g * G + j) * hd:(g * G + j + 1) * hd] for j in range(G)],
                axis=0)
             for g in range(KV)], axis=0)
        m_sc[...] = jnp.full(m_sc.shape, -jnp.inf, jnp.float32)
        l_sc[...] = jnp.zeros(l_sc.shape, jnp.float32)
        acc_sc[...] = jnp.zeros(acc_sc.shape, jnp.float32)

    # -- process this kv tile; skip tiles entirely above the causal diagonal
    @pl.when(ki * kv_tile < (qi + 1) * q_tile)
    def _attend():
        kh = k_ref[0]                                                          # (KV, Tkv, hd) bf16
        vh = v_ref[0]
        qh = q_sc[...]                                                         # (KV, G*Tq, hd) bf16
        s = jnp.einsum('gqd,gkd->gqk', qh, kh,
                       preferred_element_type=jnp.float32)                     # (KV, G*Tq, Tkv)

        row = qi * q_tile + (
            lax.broadcasted_iota(jnp.int32, (G * q_tile, kv_tile), 0) % q_tile)
        col = ki * kv_tile + lax.broadcasted_iota(jnp.int32, (G * q_tile, kv_tile), 1)
        s = jnp.where((col <= row)[None], s, -1e30)

        m_prev = m_sc[...]
        m_new = jnp.maximum(m_prev, jnp.max(s, axis=-1, keepdims=True))
        alpha = jnp.exp(m_prev - m_new)
        p = jnp.exp(s - m_new)
        l_sc[...] = alpha * l_sc[...] + jnp.sum(p, axis=-1, keepdims=True)
        acc_sc[...] = alpha * acc_sc[...] + jnp.einsum(
            'gqk,gkd->gqd', p.astype(jnp.bfloat16), vh,
            preferred_element_type=jnp.float32)
        m_sc[...] = m_new

    # -- last kv step: normalize, merge heads, output-project, add residual
    @pl.when(ki == pl.num_programs(2) - 1)
    def _finalize():
        inv_l = pl.reciprocal(l_sc[...], approx=True)
        attn = (acc_sc[...] * inv_l).astype(jnp.bfloat16)                      # (KV, G*Tq, hd)
        # one relayout back to (Tq, H*hd), then a single MXU-friendly projection
        merged = jnp.concatenate(
            [attn[g, j * q_tile:(j + 1) * q_tile, :]
             for g in range(KV) for j in range(G)], axis=-1)                   # (Tq, H*hd)
        y = jnp.dot(merged, wo_ref[...], preferred_element_type=jnp.float32)   # (Tq, D)
        o_ref[0] = x_ref[0] + y


# --------------------------------------------------------------------------- #
# Pass 3: SwiGLU FFN with d_ff streamed as a grid axis + residual
# --------------------------------------------------------------------------- #
def _ffn_kernel(x_ref, n2_ref, wg_ref, wu_ref, wd_ref, o_ref, h_sc, acc_sc):
    ci = pl.program_id(2)

    @pl.when(ci == 0)
    def _init():
        h_sc[...] = _rmsnorm(x_ref[0], n2_ref[0]).astype(jnp.bfloat16)
        acc_sc[...] = jnp.zeros(acc_sc.shape, jnp.float32)

    h = h_sc[...]                                                              # (Tq, D) bf16
    g = jnp.dot(h, wg_ref[...], preferred_element_type=jnp.float32)            # (Tq, dff_t)
    u = jnp.dot(h, wu_ref[...], preferred_element_type=jnp.float32)
    sw = (g * jax.nn.sigmoid(g) * u).astype(jnp.bfloat16)
    acc_sc[...] += jnp.dot(sw, wd_ref[...], preferred_element_type=jnp.float32)

    @pl.when(ci == pl.num_programs(2) - 1)
    def _fin():
        o_ref[0] = x_ref[0] + acc_sc[...]


# --------------------------------------------------------------------------- #
# Wrapper
# --------------------------------------------------------------------------- #
def _vmem_cap_bytes():
    try:
        return int(pltpu.get_tpu_info().vmem_capacity_bytes)
    except Exception:
        return 64 * 1024 * 1024   # conservative (v7x) fallback


def _nbytes(shape, dtype):
    n = 1
    for s in shape:
        n *= int(s)
    return n * jnp.dtype(dtype).itemsize


def _compiler_params(dim_sem, est_bytes):
    cap = _vmem_cap_bytes()
    limit = int(min(cap - 2 * 1024 * 1024, max(32 * 1024 * 1024, est_bytes)))
    return pltpu.CompilerParams(dimension_semantics=dim_sem, vmem_limit_bytes=limit)


def _const_spec(shape):
    # Constant-index (weight / norm) block: single-buffered, stays resident.
    zeros = (0,) * len(shape)
    return pl.BlockSpec(shape, lambda *_: zeros, pipeline_mode=pl.Buffered(1))


def transformer_block(x, params, *, n_heads, n_kv_heads,
                      q_tile=None, kv_tile=None, dff_tile=512):
    B, S, D = x.shape
    assert D % n_heads == 0 and n_heads % n_kv_heads == 0
    hd = D // n_heads
    KV = n_kv_heads
    G = n_heads // KV
    d_ff = params["w_gate"].shape[1]

    cap = _vmem_cap_bytes()
    default_tile = 256 if cap >= 100 * 1024 * 1024 else 128   # v5e/v6e vs v7x
    Tq = min(S, default_tile) if q_tile is None else q_tile
    Tkv = min(S, default_tile) if kv_tile is None else kv_tile
    dff_t = min(d_ff, dff_tile)
    assert S % Tq == 0 and S % Tkv == 0 and d_ff % dff_t == 0

    x = x.astype(jnp.float32)
    bf16 = jnp.bfloat16
    wq = params["wq"].astype(bf16)
    wk = params["wk"].astype(bf16)
    wv = params["wv"].astype(bf16)
    wo = params["wo"].astype(bf16)
    wg = params["w_gate"].astype(bf16)
    wu = params["w_up"].astype(bf16)
    wd = params["w_down"].astype(bf16)
    n1 = params["norm1_w"].astype(jnp.float32).reshape(1, D)
    n2 = params["norm2_w"].astype(jnp.float32).reshape(1, D)

    # ---------------- Pass 1: K/V precompute (head-grouped, bf16) ------------ #
    kv_est = (2 * _nbytes((1, Tkv, D), jnp.float32)
              + 4 * _nbytes((1, KV, Tkv, hd), bf16)
              + _nbytes((1, D), jnp.float32)
              + wk.size * wk.dtype.itemsize + wv.size * wv.dtype.itemsize)
    k_arr, v_arr = pl.pallas_call(
        functools.partial(_kv_proj_kernel, n_kv_heads=KV, head_dim=hd),
        out_shape=(jax.ShapeDtypeStruct((B, KV, S, hd), bf16),
                   jax.ShapeDtypeStruct((B, KV, S, hd), bf16)),
        grid_spec=pltpu.PrefetchScalarGridSpec(
            num_scalar_prefetch=0,
            grid=(B, S // Tkv),
            in_specs=[
                pl.BlockSpec((1, Tkv, D), lambda b, i: (b, i, 0)),
                _const_spec((1, D)),
                _const_spec((D, KV * hd)),
                _const_spec((D, KV * hd)),
            ],
            out_specs=[
                pl.BlockSpec((1, KV, Tkv, hd), lambda b, i: (b, 0, i, 0)),
                pl.BlockSpec((1, KV, Tkv, hd), lambda b, i: (b, 0, i, 0)),
            ],
        ),
        compiler_params=_compiler_params(("parallel", "parallel"), 3 * kv_est),
    )(x, n1, wk, wv)

    # ---------------- Pass 2: flash attention + residual --------------------- #
    def kv_index(b, qi, ki):
        # Clamp the kv block index below the causal diagonal: fully-masked steps
        # reuse the already-resident block -> no wasted DMA.
        ki_c = jnp.minimum(ki, ((qi + 1) * Tq - 1) // Tkv)
        return (b, 0, ki_c, 0)

    attn_est = (4 * _nbytes((1, Tq, D), jnp.float32)
                + 4 * _nbytes((1, KV, Tkv, hd), bf16)
                + _nbytes((1, D), jnp.float32)
                + wq.size * wq.dtype.itemsize + wo.size * wo.dtype.itemsize
                + _nbytes((KV, G * Tq, hd), bf16)
                + _nbytes((KV, G * Tq, hd), jnp.float32)
                + 2 * _nbytes((KV, G * Tq, 1), jnp.float32))
    x2 = pl.pallas_call(
        functools.partial(_attn_kernel, n_heads=n_heads, n_kv_heads=KV,
                          head_dim=hd, q_tile=Tq, kv_tile=Tkv),
        out_shape=jax.ShapeDtypeStruct((B, S, D), jnp.float32),
        grid_spec=pltpu.PrefetchScalarGridSpec(
            num_scalar_prefetch=0,
            grid=(B, S // Tq, S // Tkv),
            in_specs=[
                pl.BlockSpec((1, Tq, D), lambda b, qi, ki: (b, qi, 0)),   # x (q rows)
                pl.BlockSpec((1, KV, Tkv, hd), kv_index),                 # K tiles
                pl.BlockSpec((1, KV, Tkv, hd), kv_index),                 # V tiles
                _const_spec((1, D)),                                      # norm1
                _const_spec((D, n_heads * hd)),                           # Wq
                _const_spec((n_heads * hd, D)),                           # Wo
            ],
            out_specs=pl.BlockSpec((1, Tq, D), lambda b, qi, ki: (b, qi, 0)),
            scratch_shapes=[
                pltpu.VMEM((KV, G * Tq, hd), bf16),        # scaled, grouped Q (bf16)
                pltpu.VMEM((KV, G * Tq, 1), jnp.float32),  # online-softmax m
                pltpu.VMEM((KV, G * Tq, 1), jnp.float32),  # online-softmax l
                pltpu.VMEM((KV, G * Tq, hd), jnp.float32), # attention accumulator
            ],
        ),
        compiler_params=_compiler_params(("parallel", "parallel", "arbitrary"),
                                         2 * attn_est),
    )(x, k_arr, v_arr, n1, wq, wo)

    # ---------------- Pass 3: SwiGLU FFN (d_ff streamed) + residual ---------- #
    ffn_est = (4 * _nbytes((1, Tq, D), jnp.float32)
               + _nbytes((1, D), jnp.float32)
               + 4 * _nbytes((D, dff_t), bf16)
               + 2 * _nbytes((dff_t, D), bf16)
               + _nbytes((Tq, D), bf16) + _nbytes((Tq, D), jnp.float32))
    out = pl.pallas_call(
        _ffn_kernel,
        out_shape=jax.ShapeDtypeStruct((B, S, D), jnp.float32),
        grid_spec=pltpu.PrefetchScalarGridSpec(
            num_scalar_prefetch=0,
            grid=(B, S // Tq, d_ff // dff_t),
            in_specs=[
                pl.BlockSpec((1, Tq, D), lambda b, qi, ci: (b, qi, 0)),   # x2
                _const_spec((1, D)),                                      # norm2
                pl.BlockSpec((D, dff_t), lambda b, qi, ci: (0, ci)),      # W gate chunk
                pl.BlockSpec((D, dff_t), lambda b, qi, ci: (0, ci)),      # W up chunk
                pl.BlockSpec((dff_t, D), lambda b, qi, ci: (ci, 0)),      # W down chunk
            ],
            out_specs=pl.BlockSpec((1, Tq, D), lambda b, qi, ci: (b, qi, 0)),
            scratch_shapes=[
                pltpu.VMEM((Tq, D), bf16),          # RMSNorm(x2), computed once per q tile
                pltpu.VMEM((Tq, D), jnp.float32),   # down-projection accumulator
            ],
        ),
        compiler_params=_compiler_params(("parallel", "parallel", "arbitrary"),
                                         2 * ffn_est),
    )(x2, n2, wg, wu, wd)
    return out


# --------------------------------------------------------------------------- #
# Pure-JAX f32 reference (same forward pass) + test driver
# --------------------------------------------------------------------------- #
def _transformer_block_ref(x, params, *, n_heads, n_kv_heads):
    B, S, D = x.shape
    hd = D // n_heads
    G = n_heads // n_kv_heads

    def rms(v, w):
        return v * lax.rsqrt(jnp.mean(v * v, axis=-1, keepdims=True) + _RMS_EPS) * w

    h = rms(x, params["norm1_w"])
    q = (h @ params["wq"]).reshape(B, S, n_heads, hd)
    k = jnp.repeat((h @ params["wk"]).reshape(B, S, n_kv_heads, hd), G, axis=2)
    v = jnp.repeat((h @ params["wv"]).reshape(B, S, n_kv_heads, hd), G, axis=2)
    s = jnp.einsum('bqhd,bkhd->bhqk', q, k) / math.sqrt(hd)
    s = jnp.where(jnp.tril(jnp.ones((S, S), bool)), s, -jnp.inf)
    p = jax.nn.softmax(s, axis=-1)
    attn = jnp.einsum('bhqk,bkhd->bqhd', p, v).reshape(B, S, D)
    x = x + attn @ params["wo"]
    h2 = rms(x, params["norm2_w"])
    g = h2 @ params["w_gate"]
    u = h2 @ params["w_up"]
    return x + (g * jax.nn.sigmoid(g) * u) @ params["w_down"]


def init_params(key, d_model, n_heads, n_kv_heads, ff_mult=4):
    head_dim = d_model // n_heads
    d_ff = ff_mult * d_model
    ks = jax.random.split(key, 7)
    std = 0.02
    return {
        "norm1_w": jnp.ones((1, d_model), jnp.float32),
        "norm2_w": jnp.ones((1, d_model), jnp.float32),
        "wq": std * jax.random.normal(ks[0], (d_model, n_heads * head_dim), jnp.float32),
        "wk": std * jax.random.normal(ks[1], (d_model, n_kv_heads * head_dim), jnp.float32),
        "wv": std * jax.random.normal(ks[2], (d_model, n_kv_heads * head_dim), jnp.float32),
        "wo": std * jax.random.normal(ks[3], (n_heads * head_dim, d_model), jnp.float32),
        "w_gate": std * jax.random.normal(ks[4], (d_model, d_ff), jnp.float32),
        "w_up": std * jax.random.normal(ks[5], (d_model, d_ff), jnp.float32),
        "w_down": std * jax.random.normal(ks[6], (d_ff, d_model), jnp.float32),
    }


if __name__ == "__main__":
    B, S, D = 2, 16, 32
    n_heads, n_kv_heads = 4, 2

    key = jax.random.PRNGKey(0)
    kx, kp = jax.random.split(key)
    x = jax.random.normal(kx, (B, S, D), jnp.float32)
    params = init_params(kp, D, n_heads, n_kv_heads)

    # Small tiles to exercise the multi-tile flash loop, the causal tile skip and
    # the clamped kv index_map even at this tiny test size.
    out = transformer_block(x, params, n_heads=n_heads, n_kv_heads=n_kv_heads,
                            q_tile=8, kv_tile=8)
    out = jax.block_until_ready(out)
    assert out.shape == (B, S, D)
    assert bool(jnp.all(jnp.isfinite(out)))

    ref = _transformer_block_ref(x, params, n_heads=n_heads, n_kv_heads=n_kv_heads)
    err = float(jnp.max(jnp.abs(out - ref)))
    assert err < 3e-2, f"kernel/reference mismatch: {err}"

    print("KERNEL_OK")
</pallas_src>

<mosaic_0001>
module attributes {stable_mosaic.version = 11 : i64} {
  func.func @_kv_proj_kernel(%arg0: i32, %arg1: i32, %arg2: memref<1x8x32xf32, #tpu.memory_space<vmem>>, %arg3: memref<1x32xf32, #tpu.memory_space<vmem>>, %arg4: memref<32x16xbf16, #tpu.memory_space<vmem>>, %arg5: memref<32x16xbf16, #tpu.memory_space<vmem>>, %arg6: memref<1x2x8x8xbf16, #tpu.memory_space<vmem>>, %arg7: memref<1x2x8x8xbf16, #tpu.memory_space<vmem>>) attributes {dimension_semantics = [#tpu.dimension_semantics<parallel>, #tpu.dimension_semantics<parallel>], iteration_bounds = array<i64: 2, 2>, scalar_prefetch = 0 : i64, scratch_operands = 0 : i64, tpu.core_type = #tpu.core_type<tc>, window_params = [{transform_indices = @transform_0, window_bounds = array<i64: 1, 8, 32>}, {pipeline_mode = #tpu.pipeline_mode<synchronous>, transform_indices = @transform_1, window_bounds = array<i64: 1, 32>}, {pipeline_mode = #tpu.pipeline_mode<synchronous>, transform_indices = @transform_2, window_bounds = array<i64: 32, 16>}, {pipeline_mode = #tpu.pipeline_mode<synchronous>, transform_indices = @transform_3, window_bounds = array<i64: 32, 16>}, {transform_indices = @transform_4, window_bounds = array<i64: 1, 2, 8, 8>}, {transform_indices = @transform_5, window_bounds = array<i64: 1, 2, 8, 8>}]} {
    %c0 = arith.constant 0 : index
    %c0_0 = arith.constant 0 : index
    %c0_1 = arith.constant 0 : index
    %0 = vector.load %arg2[%c0, %c0_0, %c0_1] : memref<1x8x32xf32, #tpu.memory_space<vmem>>, vector<1x8x32xf32>
    %1 = vector.shape_cast %0 : vector<1x8x32xf32> to vector<8x32xf32>
    %c0_2 = arith.constant 0 : index
    %c0_3 = arith.constant 0 : index
    %2 = vector.load %arg3[%c0_2, %c0_3] : memref<1x32xf32, #tpu.memory_space<vmem>>, vector<1x32xf32>
    %3 = vector.shape_cast %2 : vector<1x32xf32> to vector<32xf32>
    %4 = arith.mulf %1, %1 : vector<8x32xf32>
    %cst = arith.constant dense<0.000000e+00> : vector<8xf32>
    %5 = vector.multi_reduction <add>, %4, %cst [1] : vector<8x32xf32> to vector<8xf32>
    %6 = vector.shape_cast %5 : vector<8xf32> to vector<8x1xf32>
    %cst_4 = arith.constant 3.200000e+01 : f32
    %7 = vector.broadcast %cst_4 : f32 to vector<8x1xf32>
    %8 = arith.divf %6, %7 : vector<8x1xf32>
    %cst_5 = arith.constant 9.99999997E-7 : f32
    %9 = vector.broadcast %cst_5 : f32 to vector<8x1xf32>
    %10 = arith.addf %8, %9 : vector<8x1xf32>
    %11 = math.rsqrt %10 : vector<8x1xf32>
    %12 = vector.broadcast %11 : vector<8x1xf32> to vector<8x32xf32>
    %13 = arith.mulf %1, %12 : vector<8x32xf32>
    %14 = vector.shape_cast %3 : vector<32xf32> to vector<1x32xf32>
    %15 = vector.broadcast %14 : vector<1x32xf32> to vector<8x32xf32>
    %16 = arith.mulf %13, %15 : vector<8x32xf32>
    %17 = arith.truncf %16 : vector<8x32xf32> to vector<8x32xbf16>
    %c0_6 = arith.constant 0 : index
    %c0_7 = arith.constant 0 : index
    %18 = vector.load %arg4[%c0_6, %c0_7] : memref<32x16xbf16, #tpu.memory_space<vmem>>, vector<32x16xbf16>
    %cst_8 = arith.constant dense<0.000000e+00> : vector<8x16xf32>
    %19 = tpu.matmul %17, %18, %cst_8 {dimension_numbers = #tpu.dot_dimension_numbers<[1], [0], [0], [1], [0, 0, 1, 1], [], []>} : vector<8x32xbf16>, vector<32x16xbf16>, vector<8x16xf32> -> vector<8x16xf32>
    %c0_9 = arith.constant 0 : index
    %c0_10 = arith.constant 0 : index
    %20 = vector.load %arg5[%c0_9, %c0_10] : memref<32x16xbf16, #tpu.memory_space<vmem>>, vector<32x16xbf16>
    %cst_11 = arith.constant dense<0.000000e+00> : vector<8x16xf32>
    %21 = tpu.matmul %17, %20, %cst_11 {dimension_numbers = #tpu.dot_dimension_numbers<[1], [0], [0], [1], [0, 0, 1, 1], [], []>} : vector<8x32xbf16>, vector<32x16xbf16>, vector<8x16xf32> -> vector<8x16xf32>
    %22 = vector.extract_strided_slice %19 {offsets = [0, 0], sizes = [8, 8], strides = [1, 1]} : vector<8x16xf32> to vector<8x8xf32>
    %23 = vector.extract_strided_slice %19 {offsets = [0, 8], sizes = [8, 8], strides = [1, 1]} : vector<8x16xf32> to vector<8x8xf32>
    %24 = vector.shape_cast %22 : vector<8x8xf32> to vector<1x8x8xf32>
    %25 = vector.shape_cast %23 : vector<8x8xf32> to vector<1x8x8xf32>
    %26 = tpu.concatenate %24, %25 in 0 : vector<1x8x8xf32>, vector<1x8x8xf32> -> vector<2x8x8xf32>
    %27 = arith.truncf %26 : vector<2x8x8xf32> to vector<2x8x8xbf16>
    %c0_12 = arith.constant 0 : index
    %c0_13 = arith.constant 0 : index
    %c0_14 = arith.constant 0 : index
    %c0_15 = arith.constant 0 : index
    %28 = vector.load %arg6[%c0_12, %c0_13, %c0_14, %c0_15] : memref<1x2x8x8xbf16, #tpu.memory_space<vmem>>, vector<1x2x8x8xbf16>
    %29 = vector.shape_cast %28 : vector<1x2x8x8xbf16> to vector<2x8x8xbf16>
    %30 = vector.shape_cast %27 : vector<2x8x8xbf16> to vector<1x2x8x8xbf16>
    tpu.vector_store %arg6[%c0_12, %c0_13, %c0_14, %c0_15], %30 {strides = array<i32>} : memref<1x2x8x8xbf16, #tpu.memory_space<vmem>>, vector<1x2x8x8xbf16>,
    %31 = vector.extract_strided_slice %21 {offsets = [0, 0], sizes = [8, 8], strides = [1, 1]} : vector<8x16xf32> to vector<8x8xf32>
    %32 = vector.extract_strided_slice %21 {offsets = [0, 8], sizes = [8, 8], strides = [1, 1]} : vector<8x16xf32> to vector<8x8xf32>
    %33 = vector.shape_cast %31 : vector<8x8xf32> to vector<1x8x8xf32>
    %34 = vector.shape_cast %32 : vector<8x8xf32> to vector<1x8x8xf32>
    %35 = tpu.concatenate %33, %34 in 0 : vector<1x8x8xf32>, vector<1x8x8xf32> -> vector<2x8x8xf32>
    %36 = arith.truncf %35 : vector<2x8x8xf32> to vector<2x8x8xbf16>
    %c0_16 = arith.constant 0 : index
    %c0_17 = arith.constant 0 : index
    %c0_18 = arith.constant 0 : index
    %c0_19 = arith.constant 0 : index
    %37 = vector.load %arg7[%c0_16, %c0_17, %c0_18, %c0_19] : memref<1x2x8x8xbf16, #tpu.memory_space<vmem>>, vector<1x2x8x8xbf16>
    %38 = vector.shape_cast %37 : vector<1x2x8x8xbf16> to vector<2x8x8xbf16>
    %39 = vector.shape_cast %36 : vector<2x8x8xbf16> to vector<1x2x8x8xbf16>
    tpu.vector_store %arg7[%c0_16, %c0_17, %c0_18, %c0_19], %39 {strides = array<i32>} : memref<1x2x8x8xbf16, #tpu.memory_space<vmem>>, vector<1x2x8x8xbf16>,
    return
  }
  func.func @transform_0(%arg0: i32, %arg1: i32) -> (i32, i32, i32) {
    %c0_i32 = arith.constant 0 : i32
    %c0_i32_0 = arith.constant 0 : i32
    return %arg0, %arg1, %c0_i32 : i32, i32, i32
  }
  func.func @transform_1(%arg0: i32, %arg1: i32) -> (i32, i32) {
    %c0_i32 = arith.constant 0 : i32
    %c0_i32_0 = arith.constant 0 : i32
    %c0_i32_1 = arith.constant 0 : i32
    return %c0_i32, %c0_i32_0 : i32, i32
  }
  func.func @transform_2(%arg0: i32, %arg1: i32) -> (i32, i32) {
    %c0_i32 = arith.constant 0 : i32
    %c0_i32_0 = arith.constant 0 : i32
    %c0_i32_1 = arith.constant 0 : i32
    return %c0_i32, %c0_i32_0 : i32, i32
  }
  func.func @transform_3(%arg0: i32, %arg1: i32) -> (i32, i32) {
    %c0_i32 = arith.constant 0 : i32
    %c0_i32_0 = arith.constant 0 : i32
    %c0_i32_1 = arith.constant 0 : i32
    return %c0_i32, %c0_i32_0 : i32, i32
  }
  func.func @transform_4(%arg0: i32, %arg1: i32) -> (i32, i32, i32, i32) {
    %c0_i32 = arith.constant 0 : i32
    %c0_i32_0 = arith.constant 0 : i32
    %c0_i32_1 = arith.constant 0 : i32
    return %arg0, %c0_i32, %arg1, %c0_i32_0 : i32, i32, i32, i32
  }
  func.func @transform_5(%arg0: i32, %arg1: i32) -> (i32, i32, i32, i32) {
    %c0_i32 = arith.constant 0 : i32
    %c0_i32_0 = arith.constant 0 : i32
    %c0_i32_1 = arith.constant 0 : i32
    return %arg0, %c0_i32, %arg1, %c0_i32_0 : i32, i32, i32, i32
  }
}

</mosaic_0001>

<llo_original>
// kernel: tpu_custom_call.1
$region0: #{tpu_custom_call.1}
  #allocation0 [shape = 'u32[]', space=smem, size = 0x4, offset = 0x4, fixed_abs, tag = 'smem constant byte address 0x4 - core index']
  #allocation1 [shape = 'u32[72,128]{1,0:T(1,128)}', space=vmem, size = 0x9000, scoped, tag = 'internal scratch']
  %s0 = inlined_call_operand.vmem [shape: f32[2,16,32], index: 0, kind: input, shape index: {}]
  %s1 = inlined_call_operand.vmem [shape: f32[1,32], index: 1, kind: input, shape index: {}]
  %s2 = inlined_call_operand.vmem [shape: bf16[32,16], index: 2, kind: input, shape index: {}]
  %s3 = inlined_call_operand.vmem [shape: bf16[32,16], index: 3, kind: input, shape index: {}]
  %s4 = inlined_call_operand.vmem [shape: bf16[2,2,16,8], index: 4, kind: output, shape index: {0}]
  %s5 = inlined_call_operand.vmem [shape: bf16[2,2,16,8], index: 5, kind: output, shape index: {1}]
  %6 = xla_tuple %s4, %s5
  %s7 = sld [smem:[#allocation0]]
  $region131: #{tpu_custom_call.1} parent=0
    _
  %s9 = ssub.s32 1, %s7
  %s10 = scalar_select 0, %s9, %s7
  $region1: #{tpu_custom_call.1} parent=0
    #allocation2 [shape = 'u8[8192]{0}', space=vmem, size = 0x2000, scoped, tag = 'output window, operand 0']
    #allocation3 [shape = 'u8[8192]{0}', space=vmem, size = 0x2000, scoped, tag = 'output window, operand 1']
    loop: start=0, step=1, limit=6
    $region2: #{tpu_custom_call.1} parent=1 // loop_pre_header
      _
    $region3: #{tpu_custom_call.1} parent=1 // loop_header
      %s12 = sphi 0, %s16
      %p13 = scmp.ge.s32.totalorder %s12, 6
      %s19 = sphi 0, %s31
      %s20 = sphi 0, %s27
      %s21 = sphi 0, %s19
      %s22 = sphi 0, %s20
      %s23 = sphi 0, %s21
      %s24 = sphi 0, %s22
      %s36 = sphi 0, %s38
      %s39 = sphi 0, %s36
      %s40 = sphi 0, %s39
      %s56 = sphi 0, %s40
      %s60 = sphi 0, %s60
      %s62 = sphi 0, %s60
      %s63 = sphi 0, %s62
      %s77 = sphi 0, %s63
      %s81 = sphi 0, %s81
      %s83 = sphi 0, %s81
      %s84 = sphi 0, %s83
      %s98 = sphi 0, %s84
      %s102 = sphi 0, %s102
      %s104 = sphi 0, %s102
      %s105 = sphi 0, %s104
      %s119 = sphi 0, %s105
      %s127 = sphi 0, %s129
      %s130 = sphi 0, %s127
      %s131 = sphi 0, %s130
      %s147 = sphi 0, %s131
      %s155 = sphi 0, %s157
      %s158 = sphi 0, %s155
      %s159 = sphi 0, %s158
      %s175 = sphi 0, %s159
    $region4: #{tpu_custom_call.1} parent=1 // loop_header_branch
      %15 = sbr.rel (%p13) target = $region8
    $region5: #{tpu_custom_call.1} parent=1 // loop_body
      %s17 = ssub.s32 %s12, 1
      %s18 = ssub.s32 %s12, 2
      %s25 = sadd.s32 1, %s20
      %p26 = scmp.ge.s32.totalorder %s25, 2
      %s27 = scalar_select %p26, 0, %s25
      %s28 = sadd.s32 1, %s19
      %s29 = scalar_select %p26, %s28, %s19
      %p30 = scmp.ge.s32.totalorder %s29, 2
      %s31 = scalar_select %p30, 0, %s29
      %s32 = ssub.s32 %s19, %s31
      %s33 = ssub.s32 %s20, %s27
      %s34 = sor.u32 %s32, %s33
      %p35 = scmp.eq.s32.totalorder %s34, 0
      %s37 = sadd.s32 %s36, 1
      %s38 = scalar_select %p35, %s36, %s37
      %p41 = pneg %p35
      %p42 = scmp.eq.s32.totalorder %s12, 3
      %p43 = por %p41, %p42
      %p44 = scmp.ne.s32.totalorder %s36, %s39
      %p45 = scmp.eq.s32.totalorder %s12, 0
      %p46 = por %p44, %p45
      %p47 = scmp.ne.s32.totalorder %s36, %s39
      %p48 = scmp.eq.s32.totalorder %s17, 3
      %p49 = por %p47, %p48
      %p50 = scmp.ne.s32.totalorder %s39, %s40
      %p51 = scmp.eq.s32.totalorder %s17, 0
      %p52 = por %p50, %p51
      %p53 = scmp.ne.s32.totalorder %s39, %s40
      %p54 = scmp.eq.s32.totalorder %s18, 3
      %p55 = por %p53, %p54
      %p57 = scmp.ne.s32.totalorder %s40, %s56
      %p58 = scmp.eq.s32.totalorder %s18, 0
      %p59 = por %p57, %p58
      %s61 = sadd.s32 %s60, 1
      %p64 = scmp.eq.s32.totalorder %s12, 3
      %p65 = scmp.ne.s32.totalorder %s60, %s62
      %p66 = scmp.eq.s32.totalorder %s12, 0
      %p67 = por %p65, %p66
      %p68 = scmp.ne.s32.totalorder %s60, %s62
      %p69 = scmp.eq.s32.totalorder %s17, 3
      %p70 = por %p68, %p69
      %p71 = scmp.ne.s32.totalorder %s62, %s63
      %p72 = scmp.eq.s32.totalorder %s17, 0
      %p73 = por %p71, %p72
      %p74 = scmp.ne.s32.totalorder %s62, %s63
      %p75 = scmp.eq.s32.totalorder %s18, 3
      %p76 = por %p74, %p75
      %p78 = scmp.ne.s32.totalorder %s63, %s77
      %p79 = scmp.eq.s32.totalorder %s18, 0
      %p80 = por %p78, %p79
      %s82 = sadd.s32 %s81, 1
      %p85 = scmp.eq.s32.totalorder %s12, 3
      %p86 = scmp.ne.s32.totalorder %s81, %s83
      %p87 = scmp.eq.s32.totalorder %s12, 0
      %p88 = por %p86, %p87
      %p89 = scmp.ne.s32.totalorder %s81, %s83
      %p90 = scmp.eq.s32.totalorder %s17, 3
      %p91 = por %p89, %p90
      %p92 = scmp.ne.s32.totalorder %s83, %s84
      %p93 = scmp.eq.s32.totalorder %s17, 0
      %p94 = por %p92, %p93
      %p95 = scmp.ne.s32.totalorder %s83, %s84
      %p96 = scmp.eq.s32.totalorder %s18, 3
      %p97 = por %p95, %p96
      %p99 = scmp.ne.s32.totalorder %s84, %s98
      %p100 = scmp.eq.s32.totalorder %s18, 0
      %p101 = por %p99, %p100
      %s103 = sadd.s32 %s102, 1
      %p106 = scmp.eq.s32.totalorder %s12, 3
      %p107 = scmp.ne.s32.totalorder %s102, %s104
      %p108 = scmp.eq.s32.totalorder %s12, 0
      %p109 = por %p107, %p108
      %p110 = scmp.ne.s32.totalorder %s102, %s104
      %p111 = scmp.eq.s32.totalorder %s17, 3
      %p112 = por %p110, %p111
      %p113 = scmp.ne.s32.totalorder %s104, %s105
      %p114 = scmp.eq.s32.totalorder %s17, 0
      %p115 = por %p113, %p114
      %p116 = scmp.ne.s32.totalorder %s104, %s105
      %p117 = scmp.eq.s32.totalorder %s18, 3
      %p118 = por %p116, %p117
      %p120 = scmp.ne.s32.totalorder %s105, %s119
      %p121 = scmp.eq.s32.totalorder %s18, 0
      %p122 = por %p120, %p121
      %s123 = ssub.s32 %s19, %s31
      %s124 = ssub.s32 %s20, %s27
      %s125 = sor.u32 %s123, %s124
      %p126 = scmp.eq.s32.totalorder %s125, 0
      %s128 = sadd.s32 %s127, 1
      %s129 = scalar_select %p126, %s127, %s128
      %p132 = pneg %p126
      %p133 = scmp.eq.s32.totalorder %s12, 3
      %p134 = por %p132, %p133
      %p135 = scmp.ne.s32.totalorder %s127, %s130
      %p136 = scmp.eq.s32.totalorder %s12, 0
      %p137 = por %p135, %p136
      %p138 = scmp.ne.s32.totalorder %s127, %s130
      %p139 = scmp.eq.s32.totalorder %s17, 3
      %p140 = por %p138, %p139
      %p141 = scmp.ne.s32.totalorder %s130, %s131
      %p142 = scmp.eq.s32.totalorder %s17, 0
      %p143 = por %p141, %p142
      %p144 = scmp.ne.s32.totalorder %s130, %s131
      %p145 = scmp.eq.s32.totalorder %s18, 3
      %p146 = por %p144, %p145
      %p148 = scmp.ne.s32.totalorder %s131, %s147
      %p149 = scmp.eq.s32.totalorder %s18, 0
      %p150 = por %p148, %p149
      %s151 = ssub.s32 %s19, %s31
      %s152 = ssub.s32 %s20, %s27
      %s153 = sor.u32 %s151, %s152
      %p154 = scmp.eq.s32.totalorder %s153, 0
      %s156 = sadd.s32 %s155, 1
      %s157 = scalar_select %p154, %s155, %s156
      %p160 = pneg %p154
      %p161 = scmp.eq.s32.totalorder %s12, 3
      %p162 = por %p160, %p161
      %p163 = scmp.ne.s32.totalorder %s155, %s158
      %p164 = scmp.eq.s32.totalorder %s12, 0
      %p165 = por %p163, %p164
      %p166 = scmp.ne.s32.totalorder %s155, %s158
      %p167 = scmp.eq.s32.totalorder %s17, 3
      %p168 = por %p166, %p167
      %p169 = scmp.ne.s32.totalorder %s158, %s159
      %p170 = scmp.eq.s32.totalorder %s17, 0
      %p171 = por %p169, %p170
      %p172 = scmp.ne.s32.totalorder %s158, %s159
      %p173 = scmp.eq.s32.totalorder %s18, 3
      %p174 = por %p172, %p173
      %p176 = scmp.ne.s32.totalorder %s159, %s175
      %p177 = scmp.eq.s32.totalorder %s18, 0
      %p178 = por %p176, %p177
      %p179 = scmp.le.s32.totalorder 1, %s12
      %p180 = scmp.lt.s32.totalorder %s12, 5
      %p181 = pnand %p179, %p180
      %p182 = pneg %p181
      // Predicated region
      $region9: #{tpu_custom_call.1} parent=5 // pred_check
        _
      $region10: #{tpu_custom_call.1} parent=5 // pred_check_branch
        %184 = sbr.rel (%p181) target = $region12
      $region11: #{tpu_custom_call.1} parent=5 // pred_region
        %s185 = ssub.s32 %s12, 1
        // Predicated region
        $region13: #{tpu_custom_call.1} parent=11 // pred_check
          %p186 = pneg %p73
        $region14: #{tpu_custom_call.1} parent=11 // pred_check_branch
          %188 = sbr.rel (%p186) target = $region16
        $region15: #{tpu_custom_call.1} parent=11 // pred_region
          _
        $region16: #{tpu_custom_call.1} parent=11 // pred_fallthru
          _
        // Predicated region
        $region17: #{tpu_custom_call.1} parent=11 // pred_check
          %p189 = pneg %p94
        $region18: #{tpu_custom_call.1} parent=11 // pred_check_branch
          %191 = sbr.rel (%p189) target = $region20
        $region19: #{tpu_custom_call.1} parent=11 // pred_region
          _
        $region20: #{tpu_custom_call.1} parent=11 // pred_fallthru
          _
        // Predicated region
        $region21: #{tpu_custom_call.1} parent=11 // pred_check
          %p192 = pneg %p115
        $region22: #{tpu_custom_call.1} parent=11 // pred_check_branch
          %194 = sbr.rel (%p192) target = $region24
        $region23: #{tpu_custom_call.1} parent=11 // pred_region
          _
        $region24: #{tpu_custom_call.1} parent=11 // pred_fallthru
          _
      $region12: #{tpu_custom_call.1} parent=5 // pred_fallthru
        _
      %p195 = scmp.lt.s32.totalorder %s12, 4
      // Predicated region
      $region25: #{tpu_custom_call.1} parent=5 // pred_check
        %p196 = pneg %p195
      $region26: #{tpu_custom_call.1} parent=5 // pred_check_branch
        %198 = sbr.rel (%p196) target = $region28
      $region27: #{tpu_custom_call.1} parent=5 // pred_region
        // Predicated region
        $region29: #{tpu_custom_call.1} parent=27 // pred_check
          %p199 = pneg %p46
        $region30: #{tpu_custom_call.1} parent=27 // pred_check_branch
          %201 = sbr.rel (%p199) target = $region32
        $region31: #{tpu_custom_call.1} parent=27 // pred_region
          %p202 = scmp.lt.s32.totalorder %s19, 1
          %s203 = scalar_select %p202, %s19, 1
          %p204 = scmp.lt.s32.totalorder %s20, 1
          %s205 = scalar_select %p204, %s20, 1
          %s206 = smul.addr %s203, 2
          %s207 = sadd.s32 %s205, %s206
          %s208 = smul.addr %s207, 8
          %s209 = scalar_lea.vmem %s0, %s208
        $region32: #{tpu_custom_call.1} parent=27 // pred_fallthru
          _
      $region28: #{tpu_custom_call.1} parent=5 // pred_fallthru
        _
      %p210 = scmp.le.s32.totalorder 1, %s12
      %p211 = scmp.lt.s32.totalorder %s12, 5
      %p212 = pnand %p210, %p211
      %p213 = pneg %p212
      // Predicated region
      $region33: #{tpu_custom_call.1} parent=5 // pred_check
        _
      $region34: #{tpu_custom_call.1} parent=5 // pred_check_branch
        %215 = sbr.rel (%p212) target = $region36
      $region35: #{tpu_custom_call.1} parent=5 // pred_region
        %s216 = ssub.s32 %s12, 1
        %p217 = scmp.lt.s32.totalorder %s21, 1
        %s218 = scalar_select %p217, %s21, 1
        %p219 = scmp.lt.s32.totalorder %s22, 1
        %s220 = scalar_select %p219, %s22, 1
        %s221 = smul.addr %s218, 2
        %s222 = sadd.s32 %s220, %s221
        %s223 = smul.addr %s222, 8
        %s224 = scalar_lea.vmem %s0, %s223
        %p225 = pneg %p52
        %p226 = pneg %p49
        %p227 = pneg %p73
        %p228 = pneg %p70
        %p229 = pneg %p94
        %p230 = pneg %p91
        %p231 = pneg %p115
        %p232 = pneg %p112
        %p233 = pneg %p143
        %p234 = pneg %p140
        %s235 = sand.u32 %s130, 1
        %s236 = sand.u32 %s130, 1
        %s237 = smul.addr %s236, 8
        %s238 = scalar_lea.vmem [#allocation2], %s237
        %p239 = pneg %p171
        %p240 = pneg %p168
        %s241 = sand.u32 %s158, 1
        %s242 = sand.u32 %s158, 1
        %s243 = smul.addr %s242, 8
        %s244 = scalar_lea.vmem [#allocation3], %s243
        %p245 = scmp.lt.s32.totalorder %s21, 1
        %s246 = scalar_select %p245, %s21, 1
        %p247 = scmp.lt.s32.totalorder %s22, 1
        %s248 = scalar_select %p247, %s22, 1
        %s249 = smul.addr %s246, 2
        %s250 = sadd.s32 %s248, %s249
        %s251 = smul.addr %s250, 8
        %s252 = scalar_lea.vmem %s0, %s251
        %v254 = vld [vmem:[%s252] sm:$0xff]
        %v255 = vld [vmem:[%s1] sm:$0x1]
        %v256 = vmul.f32 %v254, %v254
        %vm257 = vcmask 261120
        %v258 = vsel %vm257, %v256, 0.0
        %259 = vadd.xlane.f32.xlu0 %v258
        %v260 = vpop.xlane.xlu0 %259
        %v261 = vrcp.pop 32.0
        %v262 = vmul.f32 32.0, %v261
        %v263 = vsub.f32 1.0, %v262
        %v264 = vmul.f32 %v261, %v263
        %v265 = vadd.f32 %v261, %v264
        %vm266 = vweird.f32 %v261
        %v267 = vsel %vm266, %v261, %v265
        %v268 = vmul.f32 %v260, %v267
        %v269 = vadd.f32 %v268, 1e-06
        %v270 = vrsqrt.pop %v269
        %v271 = vmul.f32 %v270, %v269
        %v272 = vmul.f32 %v271, %v270
        %v273 = vmul.f32 0.5, %v272
        %v274 = vsub.f32 1.5, %v273
        %v275 = vmul.f32 %v270, %v274
        %vm276 = vweird.f32 %v269
        %vm277 = vweird.f32 %v270
        %vm278 = vmor %vm276, %vm277
        %v279 = vsel %vm278, %v270, %v275
        %v280 = vmul.f32 %v254, %v279
        %v282 = vperm.slane %v255, 0
        %v284 = vmul.f32 %v280, %v282
        %v285 = vpack.c.bf16 %v284, %v284
        %v286 = vld [vmem:[%s2] sm:$0xf]
        %v287 = vld [vmem:[%s2 + $0x4] sm:$0xf]
        %v288 = vld [vmem:[%s2 + $0x8] sm:$0xf]
        %v289 = vld [vmem:[%s2 + $0xc] sm:$0xf]
        %v294 = vunpack.c.l.b16 %v286
        %v295 = vunpack.c.l.b16 %v287
        %v296 = vunpack.c.l.b16 %v288
        %v297 = vunpack.c.l.b16 %v289
        %v298 = vpack.c.b16 %v295, %v294
        %v299 = vpack.c.b16 %v297, %v296
        %v303 = vsel %vm257, %v285, 0
        %305 = vmatpush.bf16.msra.mxu0 0
        %306 = vmatpush.bf16.msra.mxu0 0
        %307 = vmatpush.bf16.msra.mxu0 0
        %308 = vmatpush.bf16.msra.mxu0 0
        %309 = vmatpush.bf16.msra.mxu0 0
        %310 = vmatpush.bf16.msra.mxu0 0
        %311 = vmatpush.bf16.msra.mxu0 %v299
        %312 = vmatpush.bf16.msra.mxu0 %v298
        %313 = vmatmul.bf16.gmra.mxu0 %v303
        %v314 = vpop.f32.mrf.mxu0
        %v315 = vadd.f32 0.0, %v314
        %v316 = vpop.f32.mrf.mxu0
        %317 = vdwg.mxu0
        %v318 = vld [vmem:[%s3] sm:$0xf]
        %v319 = vld [vmem:[%s3 + $0x4] sm:$0xf]
        %v320 = vld [vmem:[%s3 + $0x8] sm:$0xf]
        %v321 = vld [vmem:[%s3 + $0xc] sm:$0xf]
        %v326 = vunpack.c.l.b16 %v318
        %v327 = vunpack.c.l.b16 %v319
        %v328 = vunpack.c.l.b16 %v320
        %v329 = vunpack.c.l.b16 %v321
        %v330 = vpack.c.b16 %v327, %v326
        %v331 = vpack.c.b16 %v329, %v328
        %334 = vmatpush.bf16.msra.mxu0 0
        %335 = vmatpush.bf16.msra.mxu0 0
        %336 = vmatpush.bf16.msra.mxu0 0
        %337 = vmatpush.bf16.msra.mxu0 0
        %338 = vmatpush.bf16.msra.mxu0 0
        %339 = vmatpush.bf16.msra.mxu0 0
        %340 = vmatpush.bf16.msra.mxu0 %v331
        %341 = vmatpush.bf16.msra.mxu0 %v330
        %342 = vmatmul.bf16.gmra.mxu0 %v303
        %v343 = vpop.f32.mrf.mxu0
        %v344 = vadd.f32 0.0, %v343
        %v345 = vpop.f32.mrf.mxu0
        %346 = vdwg.mxu0
        %348 = vrot.lane.b32.xlu0 %v315, 120
        %v349 = vpop.permute.xlu0 %348
        %v351 = vpack.c.bf16 %v315, %v315
        %v352 = vpack.c.bf16 %v349, %v349
        %vm353 = vcmask 60416
        %354 = vst.msk [vmem:[%s238] sm:$0xf] %vm353, %v351
        %355 = vst.msk [vmem:[%s238 + $0x4] sm:$0xf] %vm353, %v352
        %357 = vrot.lane.b32.xlu0 %v344, 120
        %v358 = vpop.permute.xlu0 %357
        %v360 = vpack.c.bf16 %v344, %v344
        %v361 = vpack.c.bf16 %v358, %v358
        %362 = vst.msk [vmem:[%s244] sm:$0xf] %vm353, %v360
        %363 = vst.msk [vmem:[%s244 + $0x4] sm:$0xf] %vm353, %v361
        %s364 = sand.u32 %s130, 1
        %s365 = sand.u32 %s130, 1
        %s366 = smul.addr %s365, 8
        %s367 = scalar_lea.vmem [#allocation2], %s366
        %s368 = sand.u32 %s158, 1
        %s369 = sand.u32 %s158, 1
        %s370 = smul.addr %s369, 8
        %s371 = scalar_lea.vmem [#allocation3], %s370
        // Predicated region
        $region37: #{tpu_custom_call.1} parent=35 // pred_check
          %p372 = pneg %p140
        $region38: #{tpu_custom_call.1} parent=35 // pred_check_branch
          %374 = sbr.rel (%p372) target = $region40
        $region39: #{tpu_custom_call.1} parent=35 // pred_region
          %s375 = smul.addr %s21, 4
          %s376 = sadd.s32 %s22, %s375
          %s377 = smul.addr %s376, 4
          %s378 = scalar_lea.vmem %s4, %s377
          // Predicated region
          $region41: #{tpu_custom_call.1} parent=39 // pred_check
            _
          $region42: #{tpu_custom_call.1} parent=39 // pred_check_branch
            %380 = sbr.rel (0) target = $region44
          $region43: #{tpu_custom_call.1} parent=39 // pred_region
            // Predicated region
            $region45: #{tpu_custom_call.1} parent=43 // pred_check
              _
            $region46: #{tpu_custom_call.1} parent=43 // pred_check_branch
              %382 = sbr.rel target = $region48
            $region47: #{tpu_custom_call.1} parent=43 // pred_region
              // Predicated region
              $region60: #{tpu_custom_call.1} parent=47 // pred_check
                _
              $region61: #{tpu_custom_call.1} parent=47 // pred_check_branch
                %400 = sbr.rel (0) target = $region63
              $region62: #{tpu_custom_call.1} parent=47 // pred_region
                loop: start=0, step=1, limit=1
                $region64: #{tpu_custom_call.1} parent=62 // loop_pre_header
                  _
                $region65: #{tpu_custom_call.1} parent=62 // loop_header
                  %s402 = sphi 0, %s406
                  %p403 = scmp.ge.s32.totalorder %s402, 1
                  %s407 = sphi %s367, %s367
                  %s408 = sphi %s378, %s378
                $region66: #{tpu_custom_call.1} parent=62 // loop_header_branch
                  %405 = sbr.rel (%p403) target = $region70
                $region67: #{tpu_custom_call.1} parent=62 // loop_body
                  _
                $region68: #{tpu_custom_call.1} parent=62 // loop_footer
                  %s406 = sadd.s32 1, %s402
                $region69: #{tpu_custom_call.1} parent=62 // loop_footer_branch
                  %401 = sbr.rel target = $region65
                $region70: #{tpu_custom_call.1} parent=62 // loop_exit
                  _
                %s410 = ssub.s32 16, 1
                loop: start=0, step=1, limit=1
                $region71: #{tpu_custom_call.1} parent=62 // loop_pre_header
                  _
                $region72: #{tpu_custom_call.1} parent=62 // loop_header
                  %s412 = sphi 0, %s416
                  %p413 = scmp.ge.s32.totalorder %s412, 1
                  %s417 = sphi %s367, %s367
                  %s418 = sphi %s378, %s378
                $region73: #{tpu_custom_call.1} parent=62 // loop_header_branch
                  %415 = sbr.rel (%p413) target = $region77
                $region74: #{tpu_custom_call.1} parent=62 // loop_body
                  %v419 = vld [vmem:[%s417] sm:%s410]
                  %420 = vst [vmem:[%s418] sm:%s410] %v419
                  %v421 = vld [vmem:[%s417 + $0x4] sm:%s410]
                  %422 = vst [vmem:[%s418 + $0x8] sm:%s410] %v421
                $region75: #{tpu_custom_call.1} parent=62 // loop_footer
                  %s416 = sadd.s32 1, %s412
                $region76: #{tpu_custom_call.1} parent=62 // loop_footer_branch
                  %411 = sbr.rel target = $region72
                $region77: #{tpu_custom_call.1} parent=62 // loop_exit
                  _
              $region63: #{tpu_custom_call.1} parent=47 // pred_fallthru
                _
            $region48: #{tpu_custom_call.1} parent=43 // pred_fallthru
              _
            // Predicated region
            $region49: #{tpu_custom_call.1} parent=43 // pred_check
              _
            $region50: #{tpu_custom_call.1} parent=43 // pred_check_branch
              %384 = sbr.rel (0) target = $region52
            $region51: #{tpu_custom_call.1} parent=43 // pred_region
              %s386 = ssub.s32 16, 1
              loop: start=0, step=1, limit=1
              $region53: #{tpu_custom_call.1} parent=51 // loop_pre_header
                _
              $region54: #{tpu_custom_call.1} parent=51 // loop_header
                %s388 = sphi 0, %s392
                %p389 = scmp.ge.s32.totalorder %s388, 1
                %s393 = sphi %s367, %s367
                %s394 = sphi %s378, %s378
              $region55: #{tpu_custom_call.1} parent=51 // loop_header_branch
                %391 = sbr.rel (%p389) target = $region59
              $region56: #{tpu_custom_call.1} parent=51 // loop_body
                %v395 = vld [vmem:[%s393] sm:%s386]
                %396 = vst [vmem:[%s394] sm:%s386] %v395
                %v397 = vld [vmem:[%s393 + $0x4] sm:%s386]
                %398 = vst [vmem:[%s394 + $0x8] sm:%s386] %v397
              $region57: #{tpu_custom_call.1} parent=51 // loop_footer
                %s392 = sadd.s32 1, %s388
              $region58: #{tpu_custom_call.1} parent=51 // loop_footer_branch
                %387 = sbr.rel target = $region54
              $region59: #{tpu_custom_call.1} parent=51 // loop_exit
                _
            $region52: #{tpu_custom_call.1} parent=43 // pred_fallthru
              _
          $region44: #{tpu_custom_call.1} parent=39 // pred_fallthru
            _
          %423 = vnop
        $region40: #{tpu_custom_call.1} parent=35 // pred_fallthru
          _
        // Predicated region
        $region78: #{tpu_custom_call.1} parent=35 // pred_check
          %p424 = pneg %p168
        $region79: #{tpu_custom_call.1} parent=35 // pred_check_branch
          %426 = sbr.rel (%p424) target = $region81
        $region80: #{tpu_custom_call.1} parent=35 // pred_region
          %s427 = smul.addr %s21, 4
          %s428 = sadd.s32 %s22, %s427
          %s429 = smul.addr %s428, 4
          %s430 = scalar_lea.vmem %s5, %s429
          // Predicated region
          $region82: #{tpu_custom_call.1} parent=80 // pred_check
            _
          $region83: #{tpu_custom_call.1} parent=80 // pred_check_branch
            %432 = sbr.rel (0) target = $region85
          $region84: #{tpu_custom_call.1} parent=80 // pred_region
            // Predicated region
            $region86: #{tpu_custom_call.1} parent=84 // pred_check
              _
            $region87: #{tpu_custom_call.1} parent=84 // pred_check_branch
              %434 = sbr.rel target = $region89
            $region88: #{tpu_custom_call.1} parent=84 // pred_region
              // Predicated region
              $region101: #{tpu_custom_call.1} parent=88 // pred_check
                _
              $region102: #{tpu_custom_call.1} parent=88 // pred_check_branch
                %452 = sbr.rel (0) target = $region104
              $region103: #{tpu_custom_call.1} parent=88 // pred_region
                loop: start=0, step=1, limit=1
                $region105: #{tpu_custom_call.1} parent=103 // loop_pre_header
                  _
                $region106: #{tpu_custom_call.1} parent=103 // loop_header
                  %s454 = sphi 0, %s458
                  %p455 = scmp.ge.s32.totalorder %s454, 1
                  %s459 = sphi %s371, %s371
                  %s460 = sphi %s430, %s430
                $region107: #{tpu_custom_call.1} parent=103 // loop_header_branch
                  %457 = sbr.rel (%p455) target = $region111
                $region108: #{tpu_custom_call.1} parent=103 // loop_body
                  _
                $region109: #{tpu_custom_call.1} parent=103 // loop_footer
                  %s458 = sadd.s32 1, %s454
                $region110: #{tpu_custom_call.1} parent=103 // loop_footer_branch
                  %453 = sbr.rel target = $region106
                $region111: #{tpu_custom_call.1} parent=103 // loop_exit
                  _
                %s462 = ssub.s32 16, 1
                loop: start=0, step=1, limit=1
                $region112: #{tpu_custom_call.1} parent=103 // loop_pre_header
                  _
                $region113: #{tpu_custom_call.1} parent=103 // loop_header
                  %s464 = sphi 0, %s468
                  %p465 = scmp.ge.s32.totalorder %s464, 1
                  %s469 = sphi %s371, %s371
                  %s470 = sphi %s430, %s430
                $region114: #{tpu_custom_call.1} parent=103 // loop_header_branch
                  %467 = sbr.rel (%p465) target = $region118
                $region115: #{tpu_custom_call.1} parent=103 // loop_body
                  %v471 = vld [vmem:[%s469] sm:%s462]
                  %472 = vst [vmem:[%s470] sm:%s462] %v471
                  %v473 = vld [vmem:[%s469 + $0x4] sm:%s462]
                  %474 = vst [vmem:[%s470 + $0x8] sm:%s462] %v473
                $region116: #{tpu_custom_call.1} parent=103 // loop_footer
                  %s468 = sadd.s32 1, %s464
                $region117: #{tpu_custom_call.1} parent=103 // loop_footer_branch
                  %463 = sbr.rel target = $region113
                $region118: #{tpu_custom_call.1} parent=103 // loop_exit
                  _
              $region104: #{tpu_custom_call.1} parent=88 // pred_fallthru
                _
            $region89: #{tpu_custom_call.1} parent=84 // pred_fallthru
              _
            // Predicated region
            $region90: #{tpu_custom_call.1} parent=84 // pred_check
              _
            $region91: #{tpu_custom_call.1} parent=84 // pred_check_branch
              %436 = sbr.rel (0) target = $region93
            $region92: #{tpu_custom_call.1} parent=84 // pred_region
              %s438 = ssub.s32 16, 1
              loop: start=0, step=1, limit=1
              $region94: #{tpu_custom_call.1} parent=92 // loop_pre_header
                _
              $region95: #{tpu_custom_call.1} parent=92 // loop_header
                %s440 = sphi 0, %s444
                %p441 = scmp.ge.s32.totalorder %s440, 1
                %s445 = sphi %s371, %s371
                %s446 = sphi %s430, %s430
              $region96: #{tpu_custom_call.1} parent=92 // loop_header_branch
                %443 = sbr.rel (%p441) target = $region100
              $region97: #{tpu_custom_call.1} parent=92 // loop_body
                %v447 = vld [vmem:[%s445] sm:%s438]
                %448 = vst [vmem:[%s446] sm:%s438] %v447
                %v449 = vld [vmem:[%s445 + $0x4] sm:%s438]
                %450 = vst [vmem:[%s446 + $0x8] sm:%s438] %v449
              $region98: #{tpu_custom_call.1} parent=92 // loop_footer
                %s444 = sadd.s32 1, %s440
              $region99: #{tpu_custom_call.1} parent=92 // loop_footer_branch
                %439 = sbr.rel target = $region95
              $region100: #{tpu_custom_call.1} parent=92 // loop_exit
                _
            $region93: #{tpu_custom_call.1} parent=84 // pred_fallthru
              _
          $region85: #{tpu_custom_call.1} parent=80 // pred_fallthru
            _
          %475 = vnop
        $region81: #{tpu_custom_call.1} parent=35 // pred_fallthru
          _
      $region36: #{tpu_custom_call.1} parent=5 // pred_fallthru
        _
      %p476 = scmp.le.s32.totalorder 2, %s12
      // Predicated region
      $region119: #{tpu_custom_call.1} parent=5 // pred_check
        %p477 = pneg %p476
      $region120: #{tpu_custom_call.1} parent=5 // pred_check_branch
        %479 = sbr.rel (%p477) target = $region122
      $region121: #{tpu_custom_call.1} parent=5 // pred_region
        %s480 = ssub.s32 %s12, 2
        // Predicated region
        $region123: #{tpu_custom_call.1} parent=121 // pred_check
          %p481 = pneg %p146
        $region124: #{tpu_custom_call.1} parent=121 // pred_check_branch
          %483 = sbr.rel (%p481) target = $region126
        $region125: #{tpu_custom_call.1} parent=121 // pred_region
          %s484 = sand.u32 %s131, 1
          %s485 = sand.u32 %s131, 1
          %s486 = smul.addr %s485, 8
          %s487 = scalar_lea.vmem [#allocation2], %s486
        $region126: #{tpu_custom_call.1} parent=121 // pred_fallthru
          _
        // Predicated region
        $region127: #{tpu_custom_call.1} parent=121 // pred_check
          %p488 = pneg %p174
        $region128: #{tpu_custom_call.1} parent=121 // pred_check_branch
          %490 = sbr.rel (%p488) target = $region130
        $region129: #{tpu_custom_call.1} parent=121 // pred_region
          %s491 = sand.u32 %s159, 1
          %s492 = sand.u32 %s159, 1
          %s493 = smul.addr %s492, 8
          %s494 = scalar_lea.vmem [#allocation3], %s493
        $region130: #{tpu_custom_call.1} parent=121 // pred_fallthru
          _
      $region122: #{tpu_custom_call.1} parent=5 // pred_fallthru
        _
    $region6: #{tpu_custom_call.1} parent=1 // loop_footer
      %s16 = sadd.s32 1, %s12
    $region7: #{tpu_custom_call.1} parent=1 // loop_footer_branch
      %11 = sbr.rel target = $region3
    $region8: #{tpu_custom_call.1} parent=1 // loop_exit
      _

</llo_original>
